<compile_context>
chip_gen: v7x
topology: tpu7x:2x2x1
jax: 0.10.0
libtpu: 0.0.40
codegen_flags: <defaults>
</compile_context>

<pallas_src>
import functools

import jax
import jax.numpy as jnp
from jax import lax
from jax.experimental import pallas as pl
from jax.experimental.pallas import tpu as pltpu

_LN_EPS = 1e-5                       # torch.nn.LayerNorm default eps
_INV_SQRT2 = 0.7071067811865476


def _round_up(n, m):
    return ((n + m - 1) // m) * m


def _ffn_kernel(x_ref, gamma_ref, beta_ref, w1_ref, b1_ref, w2_ref, b2_ref,
                o_ref, xn_ref, *, dim, dim_p, approx_gelu):
    k = pl.program_id(1)

    @pl.when(k == 0)
    def _():
        # LayerNorm, computed once per row tile, cached as bf16 for the MXU.
        x = x_ref[...].astype(jnp.float32)
        inv_dim = 1.0 / float(dim)
        mean = jnp.sum(x, axis=-1, keepdims=True) * inv_dim
        xc = x - mean
        if dim != dim_p:
            # Zero padded lanes so the two-pass variance only sees real features.
            lane = lax.broadcasted_iota(jnp.int32, xc.shape, 1)
            xc = jnp.where(lane < dim, xc, 0.0)
        var = jnp.sum(xc * xc, axis=-1, keepdims=True) * inv_dim
        xn = xc * lax.rsqrt(var + _LN_EPS)
        xn = xn * gamma_ref[...] + beta_ref[...]        # padded lanes -> 0
        xn_ref[...] = xn.astype(xn_ref.dtype)
        # The output tile's block index ignores k, so it stays VMEM-resident
        # across the whole K axis: init with the second bias and accumulate
        # directly into it (no separate f32 scratch).
        o_ref[...] = jnp.broadcast_to(b2_ref[...], o_ref.shape).astype(o_ref.dtype)

    # Linear(dim -> hidden tile): bf16 operands, f32 MXU accumulation.
    h = jnp.dot(xn_ref[...], w1_ref[...], preferred_element_type=jnp.float32)
    h = h + b1_ref[...]

    if approx_gelu:
        # tanh GELU -> EUP slot (idle under the MXU); <4e-3 difference vs erf.
        h = jax.nn.gelu(h, approximate=True)
    else:
        h = 0.5 * h * (1.0 + lax.erf(h * _INV_SQRT2))

    # TODO(synk): Dropout is eval/p=0 identity only; no training-mode RNG path.

    # Linear(hidden tile -> dim), accumulated over the hidden (K) grid axis.
    o_ref[...] += jnp.dot(h.astype(w2_ref.dtype), w2_ref[...],
                          preferred_element_type=jnp.float32)


def feed_forward(x, gamma, beta, w1, b1, w2, b2, *, tm=512, tk=None,
                 approx_gelu=True):
    """Fused LayerNorm -> Linear -> GELU -> Linear.

    x: (batch, seq, dim).  w1: (dim, hidden), w2: (hidden, dim).
    tm: requested row tile.  tk: force a hidden (K) tile (None = auto; the
    auto path holds the full weights VMEM-resident when the chip allows).
    """
    batch, seq, dim = x.shape
    hidden = w1.shape[1]
    M = batch * seq

    dim_p = _round_up(dim, 128)
    hidden_p = _round_up(hidden, 128)

    # Per-chip VMEM budget (v7x: 64 MiB, v5e/v6e: 128 MiB).
    try:
        cap = int(pltpu.get_tpu_info().vmem_capacity_bytes)
    except Exception:  # conservative default (v7x-sized)
        cap = 64 * 1024 * 1024
    budget = cap * 3 // 4

    def vmem_bytes(tm_, tk_):
        return (2 * tm_ * dim_p * 4            # x tile, double-buffered f32
                + 2 * tm_ * dim_p * 4          # out tile, double-buffered f32
                + 2 * dim_p * tk_ * 2          # W1 tile, double-buffered bf16
                + 2 * tk_ * dim_p * 2          # W2 tile, double-buffered bf16
                + tm_ * dim_p * 2              # cached LN(x) bf16 scratch
                + tm_ * tk_ * 4                # hidden intermediate headroom
                + 2 * (3 * dim_p + tk_) * 4)   # gamma/beta/b1/b2 vectors

    # Row tile: big enough to amortize weight traffic; >=2 tiles whenever
    # there are >8 rows so the "parallel" axis feeds both v7x TensorCores.
    m8 = _round_up(M, 8)
    tm_eff = min(tm, m8)
    if m8 > 8 and -(-m8 // tm_eff) < 2:
        tm_eff = _round_up(-(-m8 // 2), 8)

    if tk is None:
        # Prefer full weight residency: K grid of size 1 => constant weight
        # block index => W1/W2 are DMA'd from HBM exactly once.
        tm_res = tm_eff
        while tm_res > 256 and vmem_bytes(tm_res, hidden_p) > budget:
            tm_res = _round_up(tm_res // 2, 8)
        if vmem_bytes(tm_res, hidden_p) <= budget:
            tm_eff, tk_eff = tm_res, hidden_p
        else:
            # Weights don't fit: keep tm large and tile K with >=512-lane
            # slabs (>=1 KiB contiguous bf16 DMA segments per W1 row).
            tk_eff = 2048
            while tk_eff > 512 and vmem_bytes(tm_eff, tk_eff) > budget:
                tk_eff //= 2
            tk_eff = min(tk_eff, hidden_p)
    else:
        tk_eff = min(_round_up(tk, 128), hidden_p)

    m_p = _round_up(M, tm_eff)
    hidden_pp = _round_up(hidden_p, tk_eff)

    def pad2(a, rows, cols):
        return jnp.pad(a, ((0, rows - a.shape[0]), (0, cols - a.shape[1])))

    x2 = pad2(x.reshape(M, dim).astype(jnp.float32), m_p, dim_p)
    g2 = pad2(gamma.reshape(1, dim).astype(jnp.float32), 1, dim_p)
    be2 = pad2(beta.reshape(1, dim).astype(jnp.float32), 1, dim_p)
    w1p = pad2(w1, dim_p, hidden_pp).astype(jnp.bfloat16)    # bf16 MXU operands
    b1p = pad2(b1.reshape(1, hidden).astype(jnp.float32), 1, hidden_pp)
    w2p = pad2(w2, hidden_pp, dim_p).astype(jnp.bfloat16)
    b2p = pad2(b2.reshape(1, dim).astype(jnp.float32), 1, dim_p)

    grid = (m_p // tm_eff, hidden_pp // tk_eff)
    kernel = functools.partial(_ffn_kernel, dim=dim, dim_p=dim_p,
                               approx_gelu=approx_gelu)

    cost = pl.CostEstimate(
        flops=int(4 * M * dim * hidden),
        transcendentals=int(M * hidden),
        bytes_accessed=int(M * dim * 8 + 4 * dim * hidden + 4 * (dim + hidden)),
    )

    out = pl.pallas_call(
        kernel,
        out_shape=jax.ShapeDtypeStruct((m_p, dim_p), jnp.float32),
        grid_spec=pltpu.PrefetchScalarGridSpec(
            num_scalar_prefetch=0,
            grid=grid,
            in_specs=[
                pl.BlockSpec((tm_eff, dim_p), lambda i, k: (i, 0)),   # x tile
                pl.BlockSpec((1, dim_p), lambda i, k: (0, 0)),        # gamma
                pl.BlockSpec((1, dim_p), lambda i, k: (0, 0)),        # beta
                pl.BlockSpec((dim_p, tk_eff), lambda i, k: (0, k)),   # W1 tile
                pl.BlockSpec((1, tk_eff), lambda i, k: (0, k)),       # b1 tile
                pl.BlockSpec((tk_eff, dim_p), lambda i, k: (k, 0)),   # W2 tile
                pl.BlockSpec((1, dim_p), lambda i, k: (0, 0)),        # b2
            ],
            out_specs=pl.BlockSpec((tm_eff, dim_p), lambda i, k: (i, 0)),
            scratch_shapes=[
                pltpu.VMEM((tm_eff, dim_p), jnp.bfloat16),  # cached LN(x)
            ],
        ),
        compiler_params=pltpu.CompilerParams(
            dimension_semantics=("parallel", "arbitrary"),
            vmem_limit_bytes=int(budget),
        ),
        cost_estimate=cost,
    )(x2, g2, be2, w1p, b1p, w2p, b2p)

    return out[:M, :dim].reshape(batch, seq, dim).astype(x.dtype)


if __name__ == "__main__":
    def ref_ffn(x, gamma, beta, w1, b1, w2, b2, approx):
        m = jnp.mean(x, axis=-1, keepdims=True)
        v = jnp.mean((x - m) ** 2, axis=-1, keepdims=True)
        xn = (x - m) / jnp.sqrt(v + _LN_EPS) * gamma + beta
        h = xn @ w1 + b1
        if approx:
            h = jax.nn.gelu(h, approximate=True)
        else:
            h = 0.5 * h * (1.0 + lax.erf(h * _INV_SQRT2))
        return h @ w2 + b2

    def make_params(key, dim, hidden):
        kg, kb, kw1, kb1, kw2, kb2 = jax.random.split(key, 6)
        gamma = 1.0 + 0.1 * jax.random.normal(kg, (dim,), jnp.float32)
        beta = 0.1 * jax.random.normal(kb, (dim,), jnp.float32)
        lim1 = 1.0 / float(dim) ** 0.5
        w1 = jax.random.uniform(kw1, (dim, hidden), jnp.float32, -lim1, lim1)
        b1 = jax.random.uniform(kb1, (hidden,), jnp.float32, -lim1, lim1)
        lim2 = 1.0 / float(hidden) ** 0.5
        w2 = jax.random.uniform(kw2, (hidden, dim), jnp.float32, -lim2, lim2)
        b2 = jax.random.uniform(kb2, (dim,), jnp.float32, -lim2, lim2)
        return gamma, beta, w1, b1, w2, b2

    key = jax.random.PRNGKey(0)
    k1, k2, k3, k4 = jax.random.split(key, 4)

    # Case 1: small non-128-aligned dims (lane + row padding), exact-erf GELU,
    # full-weight-residency path (auto tk).
    x1 = jax.random.normal(k1, (2, 8, 32), jnp.float32)
    p1 = make_params(k2, 32, 64)
    out1 = feed_forward(x1, *p1, approx_gelu=False)
    jax.block_until_ready(out1)
    exp1 = ref_ffn(x1, *p1, approx=False)
    assert out1.shape == x1.shape and out1.dtype == x1.dtype
    err1 = float(jnp.max(jnp.abs(out1 - exp1)))
    assert jnp.allclose(out1, exp1, atol=2e-2, rtol=2e-2), err1

    # Case 2: 128-aligned dims, forced tk=128 to exercise the multi-step
    # hidden (K) accumulation path, default tanh GELU.
    x2 = jax.random.normal(k3, (2, 64, 128), jnp.float32)
    p2 = make_params(k4, 128, 256)
    out2 = feed_forward(x2, *p2, tk=128)
    jax.block_until_ready(out2)
    exp2 = ref_ffn(x2, *p2, approx=True)
    err2 = float(jnp.max(jnp.abs(out2 - exp2)))
    assert jnp.allclose(out2, exp2, atol=2e-2, rtol=2e-2), err2

    print("KERNEL_OK")
</pallas_src>

<mosaic_0001>
module attributes {stable_mosaic.version = 11 : i64} {
  func.func @_ffn_kernel(%arg0: i32, %arg1: i32, %arg2: memref<8x128xf32, #tpu.memory_space<vmem>>, %arg3: memref<1x128xf32, #tpu.memory_space<vmem>>, %arg4: memref<1x128xf32, #tpu.memory_space<vmem>>, %arg5: memref<128x128xbf16, #tpu.memory_space<vmem>>, %arg6: memref<1x128xf32, #tpu.memory_space<vmem>>, %arg7: memref<128x128xbf16, #tpu.memory_space<vmem>>, %arg8: memref<1x128xf32, #tpu.memory_space<vmem>>, %arg9: memref<8x128xf32, #tpu.memory_space<vmem>>, %arg10: memref<8x128xbf16, #tpu.memory_space<vmem>>) attributes {dimension_semantics = [#tpu.dimension_semantics<parallel>, #tpu.dimension_semantics<arbitrary>], iteration_bounds = array<i64: 2, 1>, scalar_prefetch = 0 : i64, scratch_operands = 1 : i64, tpu.core_type = #tpu.core_type<tc>, window_params = [{transform_indices = @transform_0, window_bounds = array<i64: 8, 128>}, {pipeline_mode = #tpu.pipeline_mode<synchronous>, transform_indices = @transform_1, window_bounds = array<i64: 1, 128>}, {pipeline_mode = #tpu.pipeline_mode<synchronous>, transform_indices = @transform_2, window_bounds = array<i64: 1, 128>}, {transform_indices = @transform_3, window_bounds = array<i64: 128, 128>}, {transform_indices = @transform_4, window_bounds = array<i64: 1, 128>}, {transform_indices = @transform_5, window_bounds = array<i64: 128, 128>}, {pipeline_mode = #tpu.pipeline_mode<synchronous>, transform_indices = @transform_6, window_bounds = array<i64: 1, 128>}, {transform_indices = @transform_7, window_bounds = array<i64: 8, 128>}]} {
    %c0_i32 = arith.constant 0 : i32
    %0 = arith.cmpi eq, %arg1, %c0_i32 : i32
    %1 = arith.extui %0 : i1 to i32
    %c0_i32_0 = arith.constant 0 : i32
    %2 = arith.cmpi ne, %1, %c0_i32_0 : i32
    scf.if %2 {
      %c0_16 = arith.constant 0 : index
      %c0_17 = arith.constant 0 : index
      %23 = vector.load %arg2[%c0_16, %c0_17] : memref<8x128xf32, #tpu.memory_space<vmem>>, vector<8x128xf32>
      %cst_18 = arith.constant dense<0.000000e+00> : vector<8xf32>
      %24 = vector.multi_reduction <add>, %23, %cst_18 [1] : vector<8x128xf32> to vector<8xf32>
      %25 = vector.shape_cast %24 : vector<8xf32> to vector<8x1xf32>
      %cst_19 = arith.constant 3.125000e-02 : f32
      %26 = vector.broadcast %cst_19 : f32 to vector<8x1xf32>
      %27 = arith.mulf %25, %26 : vector<8x1xf32>
      %28 = vector.broadcast %27 : vector<8x1xf32> to vector<8x128xf32>
      %29 = arith.subf %23, %28 : vector<8x128xf32>
      %30 = tpu.iota {dimensions = array<i32: 1>} : vector<8x128xi32>
      %c32_i32 = arith.constant 32 : i32
      %31 = vector.broadcast %c32_i32 : i32 to vector<8x128xi32>
      %32 = arith.cmpi slt, %30, %31 : vector<8x128xi32>
      %cst_20 = arith.constant 0.000000e+00 : f32
      %33 = vector.broadcast %cst_20 : f32 to vector<8x128xf32>
      %34 = arith.select %32, %29, %33 : vector<8x128xi1>, vector<8x128xf32>
      %35 = arith.mulf %34, %34 : vector<8x128xf32>
      %cst_21 = arith.constant dense<0.000000e+00> : vector<8xf32>
      %36 = vector.multi_reduction <add>, %35, %cst_21 [1] : vector<8x128xf32> to vector<8xf32>
      %37 = vector.shape_cast %36 : vector<8xf32> to vector<8x1xf32>
      %cst_22 = arith.constant 3.125000e-02 : f32
      %38 = vector.broadcast %cst_22 : f32 to vector<8x1xf32>
      %39 = arith.mulf %37, %38 : vector<8x1xf32>
      %cst_23 = arith.constant 9.99999974E-6 : f32
      %40 = vector.broadcast %cst_23 : f32 to vector<8x1xf32>
      %41 = arith.addf %39, %40 : vector<8x1xf32>
      %42 = math.rsqrt %41 : vector<8x1xf32>
      %43 = vector.broadcast %42 : vector<8x1xf32> to vector<8x128xf32>
      %44 = arith.mulf %34, %43 : vector<8x128xf32>
      %c0_24 = arith.constant 0 : index
      %c0_25 = arith.constant 0 : index
      %45 = vector.load %arg3[%c0_24, %c0_25] : memref<1x128xf32, #tpu.memory_space<vmem>>, vector<1x128xf32>
      %46 = vector.broadcast %45 : vector<1x128xf32> to vector<8x128xf32>
      %47 = arith.mulf %44, %46 : vector<8x128xf32>
      %c0_26 = arith.constant 0 : index
      %c0_27 = arith.constant 0 : index
      %48 = vector.load %arg4[%c0_26, %c0_27] : memref<1x128xf32, #tpu.memory_space<vmem>>, vector<1x128xf32>
      %49 = vector.broadcast %48 : vector<1x128xf32> to vector<8x128xf32>
      %50 = arith.addf %47, %49 : vector<8x128xf32>
      %51 = arith.truncf %50 : vector<8x128xf32> to vector<8x128xbf16>
      %c0_28 = arith.constant 0 : index
      %c0_29 = arith.constant 0 : index
      %52 = vector.load %arg10[%c0_28, %c0_29] : memref<8x128xbf16, #tpu.memory_space<vmem>>, vector<8x128xbf16>
      tpu.vector_store %arg10[%c0_28, %c0_29], %51 {strides = array<i32>} : memref<8x128xbf16, #tpu.memory_space<vmem>>, vector<8x128xbf16>,
      %c0_30 = arith.constant 0 : index
      %c0_31 = arith.constant 0 : index
      %53 = vector.load %arg8[%c0_30, %c0_31] : memref<1x128xf32, #tpu.memory_space<vmem>>, vector<1x128xf32>
      %54 = vector.shape_cast %53 : vector<1x128xf32> to vector<1x128xf32>
      %55 = vector.broadcast %54 : vector<1x128xf32> to vector<8x128xf32>
      %c0_32 = arith.constant 0 : index
      %c0_33 = arith.constant 0 : index
      %56 = vector.load %arg9[%c0_32, %c0_33] : memref<8x128xf32, #tpu.memory_space<vmem>>, vector<8x128xf32>
      tpu.vector_store %arg9[%c0_32, %c0_33], %55 {strides = array<i32>} : memref<8x128xf32, #tpu.memory_space<vmem>>, vector<8x128xf32>,
    } else {
    }
    %c0 = arith.constant 0 : index
    %c0_1 = arith.constant 0 : index
    %3 = vector.load %arg10[%c0, %c0_1] : memref<8x128xbf16, #tpu.memory_space<vmem>>, vector<8x128xbf16>
    %c0_2 = arith.constant 0 : index
    %c0_3 = arith.constant 0 : index
    %4 = vector.load %arg5[%c0_2, %c0_3] : memref<128x128xbf16, #tpu.memory_space<vmem>>, vector<128x128xbf16>
    %cst = arith.constant dense<0.000000e+00> : vector<8x128xf32>
    %5 = tpu.matmul %3, %4, %cst {dimension_numbers = #tpu.dot_dimension_numbers<[1], [0], [0], [1], [0, 0, 1, 1], [], []>} : vector<8x128xbf16>, vector<128x128xbf16>, vector<8x128xf32> -> vector<8x128xf32>
    %c0_4 = arith.constant 0 : index
    %c0_5 = arith.constant 0 : index
    %6 = vector.load %arg6[%c0_4, %c0_5] : memref<1x128xf32, #tpu.memory_space<vmem>>, vector<1x128xf32>
    %7 = vector.broadcast %6 : vector<1x128xf32> to vector<8x128xf32>
    %8 = arith.addf %5, %7 : vector<8x128xf32>
    %cst_6 = arith.constant 5.000000e-01 : f32
    %9 = vector.broadcast %cst_6 : f32 to vector<8x128xf32>
    %10 = arith.mulf %9, %8 : vector<8x128xf32>
    %cst_7 = arith.constant 0.707106769 : f32
    %11 = vector.broadcast %cst_7 : f32 to vector<8x128xf32>
    %12 = arith.mulf %8, %11 : vector<8x128xf32>
    %13 = math.erf %12 : vector<8x128xf32>
    %cst_8 = arith.constant 1.000000e+00 : f32
    %14 = vector.broadcast %cst_8 : f32 to vector<8x128xf32>
    %15 = arith.addf %14, %13 : vector<8x128xf32>
    %16 = arith.mulf %10, %15 : vector<8x128xf32>
    %c0_9 = arith.constant 0 : index
    %c0_10 = arith.constant 0 : index
    %17 = vector.load %arg9[%c0_9, %c0_10] : memref<8x128xf32, #tpu.memory_space<vmem>>, vector<8x128xf32>
    %18 = arith.truncf %16 : vector<8x128xf32> to vector<8x128xbf16>
    %c0_11 = arith.constant 0 : index
    %c0_12 = arith.constant 0 : index
    %19 = vector.load %arg7[%c0_11, %c0_12] : memref<128x128xbf16, #tpu.memory_space<vmem>>, vector<128x128xbf16>
    %cst_13 = arith.constant dense<0.000000e+00> : vector<8x128xf32>
    %20 = tpu.matmul %18, %19, %cst_13 {dimension_numbers = #tpu.dot_dimension_numbers<[1], [0], [0], [1], [0, 0, 1, 1], [], []>} : vector<8x128xbf16>, vector<128x128xbf16>, vector<8x128xf32> -> vector<8x128xf32>
    %21 = arith.addf %17, %20 : vector<8x128xf32>
    %c0_14 = arith.constant 0 : index
    %c0_15 = arith.constant 0 : index
    %22 = vector.load %arg9[%c0_14, %c0_15] : memref<8x128xf32, #tpu.memory_space<vmem>>, vector<8x128xf32>
    tpu.vector_store %arg9[%c0_14, %c0_15], %21 {strides = array<i32>} : memref<8x128xf32, #tpu.memory_space<vmem>>, vector<8x128xf32>,
    return
  }
  func.func @transform_0(%arg0: i32, %arg1: i32) -> (i32, i32) {
    %c0_i32 = arith.constant 0 : i32
    %c0_i32_0 = arith.constant 0 : i32
    return %arg0, %c0_i32 : i32, i32
  }
  func.func @transform_1(%arg0: i32, %arg1: i32) -> (i32, i32) {
    %c0_i32 = arith.constant 0 : i32
    %c0_i32_0 = arith.constant 0 : i32
    %c0_i32_1 = arith.constant 0 : i32
    return %c0_i32, %c0_i32_0 : i32, i32
  }
  func.func @transform_2(%arg0: i32, %arg1: i32) -> (i32, i32) {
    %c0_i32 = arith.constant 0 : i32
    %c0_i32_0 = arith.constant 0 : i32
    %c0_i32_1 = arith.constant 0 : i32
    return %c0_i32, %c0_i32_0 : i32, i32
  }
  func.func @transform_3(%arg0: i32, %arg1: i32) -> (i32, i32) {
    %c0_i32 = arith.constant 0 : i32
    %c0_i32_0 = arith.constant 0 : i32
    return %c0_i32, %arg1 : i32, i32
  }
  func.func @transform_4(%arg0: i32, %arg1: i32) -> (i32, i32) {
    %c0_i32 = arith.constant 0 : i32
    %c0_i32_0 = arith.constant 0 : i32
    return %c0_i32, %arg1 : i32, i32
  }
  func.func @transform_5(%arg0: i32, %arg1: i32) -> (i32, i32) {
    %c0_i32 = arith.constant 0 : i32
    %c0_i32_0 = arith.constant 0 : i32
    return %arg1, %c0_i32 : i32, i32
  }
  func.func @transform_6(%arg0: i32, %arg1: i32) -> (i32, i32) {
    %c0_i32 = arith.constant 0 : i32
    %c0_i32_0 = arith.constant 0 : i32
    %c0_i32_1 = arith.constant 0 : i32
    return %c0_i32, %c0_i32_0 : i32, i32
  }
  func.func @transform_7(%arg0: i32, %arg1: i32) -> (i32, i32) {
    %c0_i32 = arith.constant 0 : i32
    %c0_i32_0 = arith.constant 0 : i32
    return %arg0, %c0_i32 : i32, i32
  }
}

</mosaic_0001>

<llo_original>
// kernel: tpu_custom_call.1
$region0: #{tpu_custom_call.1}
  #allocation0 [shape = 'u32[]', space=smem, size = 0x4, offset = 0x4, fixed_abs, tag = 'smem constant byte address 0x4 - core index']
  #allocation1 [shape = 'u32[144,128]{1,0:T(1,128)}', space=vmem, size = 0x12000, scoped, tag = 'internal scratch']
  #allocation2 [shape = 'bf16[8,128]{1,0:T(8,128)(2,1)}', space=vmem, size = 0x800, scoped, tag = 'scratch operand']
  %s0 = inlined_call_operand.hbm [shape: f32[16,128], index: 0, kind: input, shape index: {}]
  %s1 = inlined_call_operand.vmem [shape: f32[1,128], index: 1, kind: input, shape index: {}]
  %s2 = inlined_call_operand.vmem [shape: f32[1,128], index: 2, kind: input, shape index: {}]
  %s3 = inlined_call_operand.hbm [shape: bf16[128,128], index: 3, kind: input, shape index: {}]
  %s4 = inlined_call_operand.vmem [shape: f32[1,128], index: 4, kind: input, shape index: {}]
  %s5 = inlined_call_operand.hbm [shape: bf16[128,128], index: 5, kind: input, shape index: {}]
  %s6 = inlined_call_operand.vmem [shape: f32[1,128], index: 6, kind: input, shape index: {}]
  %s7 = inlined_call_operand.hbm [shape: f32[16,128], index: 7, kind: output, shape index: {}]
  %s8 = sld [smem:[#allocation0]]
  $region77: #{tpu_custom_call.1} parent=0
    _
  %s10 = ssub.s32 1, %s8
  %s11 = scalar_select 0, %s10, %s8
  $region1: #{tpu_custom_call.1} parent=0
    #allocation3 [shape = 'u8[8192]{0}', space=vmem, size = 0x2000, scoped, tag = 'input window, operand 0']
    #allocation4 [shape = 's32[2]{0}', space=sflag, size = 0x8, scoped, tag = 'scoped memory for tpu_custom_call.1']
    #allocation5 [shape = 's32[2]{0}', space=sflag, size = 0x8, scoped, tag = 'scoped memory for tpu_custom_call.1']
    #allocation6 [shape = 'u8[32768]{0}', space=vmem, size = 0x8000, scoped, tag = 'input window, operand 3, single buffered']
    #allocation7 [shape = 's32[1]{0}', space=sflag, size = 0x4, scoped, tag = 'scoped memory for tpu_custom_call.1']
    #allocation8 [shape = 'u8[32768]{0}', space=vmem, size = 0x8000, scoped, tag = 'input window, operand 5, single buffered']
    #allocation9 [shape = 'u8[8192]{0}', space=vmem, size = 0x2000, scoped, tag = 'output window, operand 0']
    %12 = vsyncpa [#allocation4], 0
    %s13 = scalar_lea.sflag [#allocation4], 1
    %14 = vsyncpa %s13, 0
    %15 = vsyncpa [#allocation7], 0
    %16 = vsyncpa [#allocation5], 0
    %s17 = scalar_lea.sflag [#allocation5], 1
    %18 = vsyncpa %s17, 0
    loop: start=0, step=1, limit=4
    $region2: #{tpu_custom_call.1} parent=1 // loop_pre_header
      _
    $region3: #{tpu_custom_call.1} parent=1 // loop_header
      %s20 = sphi 0, %s24
      %p21 = scmp.ge.s32.totalorder %s20, 4
      %s27 = sphi 0, %s39
      %s28 = sphi 0, %s35
      %s29 = sphi 0, %s27
      %s30 = sphi 0, %s28
      %s31 = sphi 0, %s29
      %s32 = sphi 0, %s30
      %s42 = sphi 0, %s44
      %s45 = sphi 0, %s42
      %s46 = sphi 0, %s45
      %s62 = sphi 0, %s46
      %s66 = sphi 0, %s66
      %s68 = sphi 0, %s66
      %s69 = sphi 0, %s68
      %s83 = sphi 0, %s69
      %s87 = sphi 0, %s87
      %s89 = sphi 0, %s87
      %s90 = sphi 0, %s89
      %s104 = sphi 0, %s90
      %s110 = sphi 0, %s112
      %s113 = sphi 0, %s110
      %s114 = sphi 0, %s113
      %s130 = sphi 0, %s114
      %s136 = sphi 0, %s138
      %s139 = sphi 0, %s136
      %s140 = sphi 0, %s139
      %s156 = sphi 0, %s140
      %s162 = sphi 0, %s164
      %s165 = sphi 0, %s162
      %s166 = sphi 0, %s165
      %s182 = sphi 0, %s166
      %s186 = sphi 0, %s186
      %s188 = sphi 0, %s186
      %s189 = sphi 0, %s188
      %s203 = sphi 0, %s189
      %s209 = sphi 0, %s211
      %s212 = sphi 0, %s209
      %s213 = sphi 0, %s212
      %s229 = sphi 0, %s213
    $region4: #{tpu_custom_call.1} parent=1 // loop_header_branch
      %23 = sbr.rel (%p21) target = $region8
    $region5: #{tpu_custom_call.1} parent=1 // loop_body
      %s25 = ssub.s32 %s20, 1
      %s26 = ssub.s32 %s20, 2
      %s33 = sadd.s32 1, %s28
      %p34 = scmp.ge.s32.totalorder %s33, 1
      %s35 = scalar_select %p34, 0, %s33
      %s36 = sadd.s32 1, %s27
      %s37 = scalar_select %p34, %s36, %s27
      %p38 = scmp.ge.s32.totalorder %s37, 2
      %s39 = scalar_select %p38, 0, %s37
      %s40 = ssub.s32 %s27, %s39
      %p41 = scmp.eq.s32.totalorder %s40, 0
      %s43 = sadd.s32 %s42, 1
      %s44 = scalar_select %p41, %s42, %s43
      %p47 = pneg %p41
      %p48 = scmp.eq.s32.totalorder %s20, 1
      %p49 = por %p47, %p48
      %p50 = scmp.ne.s32.totalorder %s42, %s45
      %p51 = scmp.eq.s32.totalorder %s20, 0
      %p52 = por %p50, %p51
      %p53 = scmp.ne.s32.totalorder %s42, %s45
      %p54 = scmp.eq.s32.totalorder %s25, 1
      %p55 = por %p53, %p54
      %p56 = scmp.ne.s32.totalorder %s45, %s46
      %p57 = scmp.eq.s32.totalorder %s25, 0
      %p58 = por %p56, %p57
      %p59 = scmp.ne.s32.totalorder %s45, %s46
      %p60 = scmp.eq.s32.totalorder %s26, 1
      %p61 = por %p59, %p60
      %p63 = scmp.ne.s32.totalorder %s46, %s62
      %p64 = scmp.eq.s32.totalorder %s26, 0
      %p65 = por %p63, %p64
      %s67 = sadd.s32 %s66, 1
      %p70 = scmp.eq.s32.totalorder %s20, 1
      %p71 = scmp.ne.s32.totalorder %s66, %s68
      %p72 = scmp.eq.s32.totalorder %s20, 0
      %p73 = por %p71, %p72
      %p74 = scmp.ne.s32.totalorder %s66, %s68
      %p75 = scmp.eq.s32.totalorder %s25, 1
      %p76 = por %p74, %p75
      %p77 = scmp.ne.s32.totalorder %s68, %s69
      %p78 = scmp.eq.s32.totalorder %s25, 0
      %p79 = por %p77, %p78
      %p80 = scmp.ne.s32.totalorder %s68, %s69
      %p81 = scmp.eq.s32.totalorder %s26, 1
      %p82 = por %p80, %p81
      %p84 = scmp.ne.s32.totalorder %s69, %s83
      %p85 = scmp.eq.s32.totalorder %s26, 0
      %p86 = por %p84, %p85
      %s88 = sadd.s32 %s87, 1
      %p91 = scmp.eq.s32.totalorder %s20, 1
      %p92 = scmp.ne.s32.totalorder %s87, %s89
      %p93 = scmp.eq.s32.totalorder %s20, 0
      %p94 = por %p92, %p93
      %p95 = scmp.ne.s32.totalorder %s87, %s89
      %p96 = scmp.eq.s32.totalorder %s25, 1
      %p97 = por %p95, %p96
      %p98 = scmp.ne.s32.totalorder %s89, %s90
      %p99 = scmp.eq.s32.totalorder %s25, 0
      %p100 = por %p98, %p99
      %p101 = scmp.ne.s32.totalorder %s89, %s90
      %p102 = scmp.eq.s32.totalorder %s26, 1
      %p103 = por %p101, %p102
      %p105 = scmp.ne.s32.totalorder %s90, %s104
      %p106 = scmp.eq.s32.totalorder %s26, 0
      %p107 = por %p105, %p106
      %s108 = ssub.s32 %s28, %s35
      %p109 = scmp.eq.s32.totalorder %s108, 0
      %s111 = sadd.s32 %s110, 1
      %s112 = scalar_select %p109, %s110, %s111
      %p115 = pneg %p109
      %p116 = scmp.eq.s32.totalorder %s20, 1
      %p117 = por %p115, %p116
      %p118 = scmp.ne.s32.totalorder %s110, %s113
      %p119 = scmp.eq.s32.totalorder %s20, 0
      %p120 = por %p118, %p119
      %p121 = scmp.ne.s32.totalorder %s110, %s113
      %p122 = scmp.eq.s32.totalorder %s25, 1
      %p123 = por %p121, %p122
      %p124 = scmp.ne.s32.totalorder %s113, %s114
      %p125 = scmp.eq.s32.totalorder %s25, 0
      %p126 = por %p124, %p125
      %p127 = scmp.ne.s32.totalorder %s113, %s114
      %p128 = scmp.eq.s32.totalorder %s26, 1
      %p129 = por %p127, %p128
      %p131 = scmp.ne.s32.totalorder %s114, %s130
      %p132 = scmp.eq.s32.totalorder %s26, 0
      %p133 = por %p131, %p132
      %s134 = ssub.s32 %s28, %s35
      %p135 = scmp.eq.s32.totalorder %s134, 0
      %s137 = sadd.s32 %s136, 1
      %s138 = scalar_select %p135, %s136, %s137
      %p141 = pneg %p135
      %p142 = scmp.eq.s32.totalorder %s20, 1
      %p143 = por %p141, %p142
      %p144 = scmp.ne.s32.totalorder %s136, %s139
      %p145 = scmp.eq.s32.totalorder %s20, 0
      %p146 = por %p144, %p145
      %p147 = scmp.ne.s32.totalorder %s136, %s139
      %p148 = scmp.eq.s32.totalorder %s25, 1
      %p149 = por %p147, %p148
      %p150 = scmp.ne.s32.totalorder %s139, %s140
      %p151 = scmp.eq.s32.totalorder %s25, 0
      %p152 = por %p150, %p151
      %p153 = scmp.ne.s32.totalorder %s139, %s140
      %p154 = scmp.eq.s32.totalorder %s26, 1
      %p155 = por %p153, %p154
      %p157 = scmp.ne.s32.totalorder %s140, %s156
      %p158 = scmp.eq.s32.totalorder %s26, 0
      %p159 = por %p157, %p158
      %s160 = ssub.s32 %s28, %s35
      %p161 = scmp.eq.s32.totalorder %s160, 0
      %s163 = sadd.s32 %s162, 1
      %s164 = scalar_select %p161, %s162, %s163
      %p167 = pneg %p161
      %p168 = scmp.eq.s32.totalorder %s20, 1
      %p169 = por %p167, %p168
      %p170 = scmp.ne.s32.totalorder %s162, %s165
      %p171 = scmp.eq.s32.totalorder %s20, 0
      %p172 = por %p170, %p171
      %p173 = scmp.ne.s32.totalorder %s162, %s165
      %p174 = scmp.eq.s32.totalorder %s25, 1
      %p175 = por %p173, %p174
      %p176 = scmp.ne.s32.totalorder %s165, %s166
      %p177 = scmp.eq.s32.totalorder %s25, 0
      %p178 = por %p176, %p177
      %p179 = scmp.ne.s32.totalorder %s165, %s166
      %p180 = scmp.eq.s32.totalorder %s26, 1
      %p181 = por %p179, %p180
      %p183 = scmp.ne.s32.totalorder %s166, %s182
      %p184 = scmp.eq.s32.totalorder %s26, 0
      %p185 = por %p183, %p184
      %s187 = sadd.s32 %s186, 1
      %p190 = scmp.eq.s32.totalorder %s20, 1
      %p191 = scmp.ne.s32.totalorder %s186, %s188
      %p192 = scmp.eq.s32.totalorder %s20, 0
      %p193 = por %p191, %p192
      %p194 = scmp.ne.s32.totalorder %s186, %s188
      %p195 = scmp.eq.s32.totalorder %s25, 1
      %p196 = por %p194, %p195
      %p197 = scmp.ne.s32.totalorder %s188, %s189
      %p198 = scmp.eq.s32.totalorder %s25, 0
      %p199 = por %p197, %p198
      %p200 = scmp.ne.s32.totalorder %s188, %s189
      %p201 = scmp.eq.s32.totalorder %s26, 1
      %p202 = por %p200, %p201
      %p204 = scmp.ne.s32.totalorder %s189, %s203
      %p205 = scmp.eq.s32.totalorder %s26, 0
      %p206 = por %p204, %p205
      %s207 = ssub.s32 %s27, %s39
      %p208 = scmp.eq.s32.totalorder %s207, 0
      %s210 = sadd.s32 %s209, 1
      %s211 = scalar_select %p208, %s209, %s210
      %p214 = pneg %p208
      %p215 = scmp.eq.s32.totalorder %s20, 1
      %p216 = por %p214, %p215
      %p217 = scmp.ne.s32.totalorder %s209, %s212
      %p218 = scmp.eq.s32.totalorder %s20, 0
      %p219 = por %p217, %p218
      %p220 = scmp.ne.s32.totalorder %s209, %s212
      %p221 = scmp.eq.s32.totalorder %s25, 1
      %p222 = por %p220, %p221
      %p223 = scmp.ne.s32.totalorder %s212, %s213
      %p224 = scmp.eq.s32.totalorder %s25, 0
      %p225 = por %p223, %p224
      %p226 = scmp.ne.s32.totalorder %s212, %s213
      %p227 = scmp.eq.s32.totalorder %s26, 1
      %p228 = por %p226, %p227
      %p230 = scmp.ne.s32.totalorder %s213, %s229
      %p231 = scmp.eq.s32.totalorder %s26, 0
      %p232 = por %p230, %p231
      %p233 = scmp.le.s32.totalorder 1, %s20
      %p234 = scmp.lt.s32.totalorder %s20, 3
      %p235 = pnand %p233, %p234
      %p236 = pneg %p235
      // Predicated region
      $region9: #{tpu_custom_call.1} parent=5 // pred_check
        _
      $region10: #{tpu_custom_call.1} parent=5 // pred_check_branch
        %238 = sbr.rel (%p235) target = $region12
      $region11: #{tpu_custom_call.1} parent=5 // pred_region
        %s239 = ssub.s32 %s20, 1
        // Predicated region
        $region13: #{tpu_custom_call.1} parent=11 // pred_check
          %p240 = pneg %p79
        $region14: #{tpu_custom_call.1} parent=11 // pred_check_branch
          %242 = sbr.rel (%p240) target = $region16
        $region15: #{tpu_custom_call.1} parent=11 // pred_region
          _
        $region16: #{tpu_custom_call.1} parent=11 // pred_fallthru
          _
        // Predicated region
        $region17: #{tpu_custom_call.1} parent=11 // pred_check
          %p243 = pneg %p100
        $region18: #{tpu_custom_call.1} parent=11 // pred_check_branch
          %245 = sbr.rel (%p243) target = $region20
        $region19: #{tpu_custom_call.1} parent=11 // pred_region
          _
        $region20: #{tpu_custom_call.1} parent=11 // pred_fallthru
          _
        // Predicated region
        $region21: #{tpu_custom_call.1} parent=11 // pred_check
          %p246 = pneg %p126
        $region22: #{tpu_custom_call.1} parent=11 // pred_check_branch
          %248 = sbr.rel (%p246) target = $region24
        $region23: #{tpu_custom_call.1} parent=11 // pred_region
          %s250 = ssub.s32 1024, 1024
          %251 = vsyncadd [#allocation7], %s250
          %s252 = smul.addr %s30, 64
          %s253 = scalar_lea.hbm %s3, %s252
          %s254 = sshll.u32 [#allocation6], 4
          %s255 = int_to_ptr.vmem [resolvable:$true] %s254
          %260 = dma.hbm_to_vmem [thread:$0]  %s253, 1024, %s255, [#allocation7], 64, 64, 4
        $region24: #{tpu_custom_call.1} parent=11 // pred_fallthru
          _
        // Predicated region
        $region25: #{tpu_custom_call.1} parent=11 // pred_check
          %p261 = pneg %p152
        $region26: #{tpu_custom_call.1} parent=11 // pred_check_branch
          %263 = sbr.rel (%p261) target = $region28
        $region27: #{tpu_custom_call.1} parent=11 // pred_region
          %p264 = scmp.lt.s32.totalorder %s30, 0
          %s265 = scalar_select %p264, %s30, 0
          %s266 = scalar_lea.vmem %s4, %s265
        $region28: #{tpu_custom_call.1} parent=11 // pred_fallthru
          _
        // Predicated region
        $region29: #{tpu_custom_call.1} parent=11 // pred_check
          %p267 = pneg %p178
        $region30: #{tpu_custom_call.1} parent=11 // pred_check_branch
          %269 = sbr.rel (%p267) target = $region32
        $region31: #{tpu_custom_call.1} parent=11 // pred_region
          %s270 = smul.u32 16, %s30
          %s272 = ssub.s32 1024, 1024
          %273 = vsyncadd [#allocation7], %s272
          %s274 = smul.addr %s270, 64
          %s275 = scalar_lea.hbm %s5, %s274
          %s276 = sshll.u32 [#allocation8], 4
          %s277 = int_to_ptr.vmem [resolvable:$true] %s276
          %282 = dma.hbm_to_vmem [thread:$0]  %s275, 1024, %s277, [#allocation7], 64, 64, 4
        $region32: #{tpu_custom_call.1} parent=11 // pred_fallthru
          _
        // Predicated region
        $region33: #{tpu_custom_call.1} parent=11 // pred_check
          %p283 = pneg %p199
        $region34: #{tpu_custom_call.1} parent=11 // pred_check_branch
          %285 = sbr.rel (%p283) target = $region36
        $region35: #{tpu_custom_call.1} parent=11 // pred_region
          _
        $region36: #{tpu_custom_call.1} parent=11 // pred_fallthru
          _
      $region12: #{tpu_custom_call.1} parent=5 // pred_fallthru
        _
      %p286 = scmp.lt.s32.totalorder %s20, 2
      // Predicated region
      $region37: #{tpu_custom_call.1} parent=5 // pred_check
        %p287 = pneg %p286
      $region38: #{tpu_custom_call.1} parent=5 // pred_check_branch
        %289 = sbr.rel (%p287) target = $region40
      $region39: #{tpu_custom_call.1} parent=5 // pred_region
        // Predicated region
        $region41: #{tpu_custom_call.1} parent=39 // pred_check
          %p290 = pneg %p52
        $region42: #{tpu_custom_call.1} parent=39 // pred_check_branch
          %292 = sbr.rel (%p290) target = $region44
        $region43: #{tpu_custom_call.1} parent=39 // pred_region
          %s293 = sand.u32 %s42, 1
          %s294 = scalar_lea.sflag [#allocation4], %s293
          %s295 = sand.u32 %s42, 1
          %s296 = smul.addr %s295, 8
          %s297 = scalar_lea.vmem [#allocation3], %s296
          %s299 = ssub.s32 128, 128
          %300 = vsyncadd %s294, %s299
          %s301 = smul.addr %s27, 128
          %s302 = scalar_lea.hbm %s0, %s301
          %s304 = sshll.u32 %s297, 4
          %s305 = int_to_ptr.vmem [resolvable:$true] %s304
          %307 = dma.hbm_to_vmem [thread:$0]  %s302, 128, %s305, %s294
        $region44: #{tpu_custom_call.1} parent=39 // pred_fallthru
          _
      $region40: #{tpu_custom_call.1} parent=5 // pred_fallthru
        _
      %p308 = scmp.le.s32.totalorder 1, %s20
      %p309 = scmp.lt.s32.totalorder %s20, 3
      %p310 = pnand %p308, %p309
      %p311 = pneg %p310
      // Predicated region
      $region45: #{tpu_custom_call.1} parent=5 // pred_check
        _
      $region46: #{tpu_custom_call.1} parent=5 // pred_check_branch
        %313 = sbr.rel (%p310) target = $region48
      $region47: #{tpu_custom_call.1} parent=5 // pred_region
        %s314 = ssub.s32 %s20, 1
        %s315 = sand.u32 %s45, 1
        %s316 = scalar_lea.sflag [#allocation4], %s315
        %s317 = sand.u32 %s45, 1
        %s318 = smul.addr %s317, 8
        %s319 = scalar_lea.vmem [#allocation3], %s318
        // Predicated region
        $region49: #{tpu_custom_call.1} parent=47 // pred_check
          %p320 = pneg %p58
        $region50: #{tpu_custom_call.1} parent=47 // pred_check_branch
          %322 = sbr.rel (%p320) target = $region52
        $region51: #{tpu_custom_call.1} parent=47 // pred_region
          %323 = dma.done %s316, 128
        $region52: #{tpu_custom_call.1} parent=47 // pred_fallthru
          _
        // Predicated region
        $region53: #{tpu_custom_call.1} parent=47 // pred_check
          %p324 = pneg %p126
        $region54: #{tpu_custom_call.1} parent=47 // pred_check_branch
          %326 = sbr.rel (%p324) target = $region56
        $region55: #{tpu_custom_call.1} parent=47 // pred_region
          %327 = dma.done [#allocation7], 1024
        $region56: #{tpu_custom_call.1} parent=47 // pred_fallthru
          _
        // Predicated region
        $region57: #{tpu_custom_call.1} parent=47 // pred_check
          %p328 = pneg %p178
        $region58: #{tpu_custom_call.1} parent=47 // pred_check_branch
          %330 = sbr.rel (%p328) target = $region60
        $region59: #{tpu_custom_call.1} parent=47 // pred_region
          %331 = dma.done [#allocation7], 1024
        $region60: #{tpu_custom_call.1} parent=47 // pred_fallthru
          _
        %s332 = sand.u32 %s45, 1
        %s333 = scalar_lea.sflag [#allocation4], %s332
        %s334 = sand.u32 %s45, 1
        %s335 = smul.addr %s334, 8
        %s336 = scalar_lea.vmem [#allocation3], %s335
        %p337 = pneg %p58
        %p338 = pneg %p55
        %p339 = pneg %p79
        %p340 = pneg %p76
        %p341 = pneg %p100
        %p342 = pneg %p97
        %p343 = pneg %p126
        %p344 = pneg %p123
        %p345 = scmp.lt.s32.totalorder %s30, 0
        %s346 = scalar_select %p345, %s30, 0
        %s347 = scalar_lea.vmem %s4, %s346
        %p348 = pneg %p152
        %p349 = pneg %p149
        %p350 = pneg %p178
        %p351 = pneg %p175
        %p352 = pneg %p199
        %p353 = pneg %p196
        %p354 = pneg %p225
        %p355 = pneg %p222
        %s356 = sand.u32 %s212, 1
        %s357 = scalar_lea.sflag [#allocation5], %s356
        %s358 = sand.u32 %s212, 1
        %s359 = smul.addr %s358, 8
        %s360 = scalar_lea.vmem [#allocation9], %s359
        %p361 = scmp.lt.s32.totalorder %s30, 0
        %s362 = scalar_select %p361, %s30, 0
        %s363 = scalar_lea.vmem %s4, %s362
        %s364 = smul.u32 16, %s30
        %p366 = scmp.eq.s32.totalorder %s30, 0
        // Predicated region
        $region61: #{tpu_custom_call.1} parent=47 // pred_check
          %p367 = pneg %p366
        $region62: #{tpu_custom_call.1} parent=47 // pred_check_branch
          %369 = sbr.rel (%p367) target = $region64
        $region63: #{tpu_custom_call.1} parent=47 // pred_region
          %v370 = vld [vmem:[%s319] sm:$0xff]
          %371 = vadd.xlane.f32.xlu0 %v370
          %v372 = vpop.xlane.xlu0 %371
          %v373 = vmul.f32 %v372, 0.03125
          %v374 = vsub.f32 %v370, %v373
          %v375 = vlaneseq
          %v376 = vand.u32 %v375, 127
          %vm377 = vcmp.lt.s32.totalorder %v376, 32
          %v378 = vsel %vm377, %v374, 0.0
          %v379 = vmul.f32 %v378, %v378
          %380 = vadd.xlane.f32.xlu0 %v379
          %v381 = vpop.xlane.xlu0 %380
          %v382 = vmul.f32 %v381, 0.03125
          %v383 = vadd.f32 %v382, 1e-05
          %v384 = vrsqrt.pop %v383
          %v385 = vmul.f32 %v378, %v384
          %v386 = vld [vmem:[%s1] sm:$0x1]
          %v388 = vlaneseq
          %v389 = vshrl.u32 %v388, 7
          %v390 = vsub.s32 0, %v389
          %v391 = vrot.slane %v386, %v390
          %v393 = vmul.f32 %v385, %v391
          %v394 = vld [vmem:[%s2] sm:$0x1]
          %v396 = vlaneseq
          %v397 = vshrl.u32 %v396, 7
          %v398 = vsub.s32 0, %v397
          %v399 = vrot.slane %v394, %v398
          %v401 = vadd.f32 %v393, %v399
          %v402 = vpack.c.bf16 %v401, %v401
          %403 = vst [vmem:[#allocation2] sm:$0xf] %v402
          %v404 = vld [vmem:[%s6] sm:$0x1]
          %v406 = vlaneseq
          %v407 = vshrl.u32 %v406, 7
          %v408 = vsub.s32 0, %v407
          %v409 = vrot.slane %v404, %v408
          %411 = vst [vmem:[%s360] sm:$0xff] %v409
        $region64: #{tpu_custom_call.1} parent=47 // pred_fallthru
          _
        %v412 = vld [vmem:[#allocation2] sm:$0xf]
        %v413 = vld [vmem:[#allocation6] sm:$0xf]
        %v414 = vld [vmem:[#allocation6 + $0x4] sm:$0xf]
        %v415 = vld [vmem:[#allocation6 + $0x8] sm:$0xf]
        %v416 = vld [vmem:[#allocation6 + $0xc] sm:$0xf]
        %v417 = vld [vmem:[#allocation6 + $0x10] sm:$0xf]
        %v418 = vld [vmem:[#allocation6 + $0x14] sm:$0xf]
        %v419 = vld [vmem:[#allocation6 + $0x18] sm:$0xf]
        %v420 = vld [vmem:[#allocation6 + $0x1c] sm:$0xf]
        %v421 = vld [vmem:[#allocation6 + $0x20] sm:$0xf]
        %v422 = vld [vmem:[#allocation6 + $0x24] sm:$0xf]
        %v423 = vld [vmem:[#allocation6 + $0x28] sm:$0xf]
        %v424 = vld [vmem:[#allocation6 + $0x2c] sm:$0xf]
        %v425 = vld [vmem:[#allocation6 + $0x30] sm:$0xf]
        %v426 = vld [vmem:[#allocation6 + $0x34] sm:$0xf]
        %v427 = vld [vmem:[#allocation6 + $0x38] sm:$0xf]
        %v428 = vld [vmem:[#allocation6 + $0x3c] sm:$0xf]
        %v429 = vld [vmem:[%s363] sm:$0x1]
        %v431 = vlaneseq
        %v432 = vshrl.u32 %v431, 7
        %v433 = vsub.s32 0, %v432
        %v434 = vrot.slane %v429, %v433
        %v452 = vunpack.c.l.b16 %v413
        %v453 = vunpack.c.l.b16 %v414
        %v454 = vunpack.c.l.b16 %v415
        %v455 = vunpack.c.l.b16 %v416
        %v456 = vunpack.c.l.b16 %v417
        %v457 = vunpack.c.l.b16 %v418
        %v458 = vunpack.c.l.b16 %v419
        %v459 = vunpack.c.l.b16 %v420
        %v460 = vunpack.c.l.b16 %v421
        %v461 = vunpack.c.l.b16 %v422
        %v462 = vunpack.c.l.b16 %v423
        %v463 = vunpack.c.l.b16 %v424
        %v464 = vunpack.c.l.b16 %v425
        %v465 = vunpack.c.l.b16 %v426
        %v466 = vunpack.c.l.b16 %v427
        %v467 = vunpack.c.l.b16 %v428
        %v468 = vpack.c.b16 %v453, %v452
        %v469 = vpack.c.b16 %v455, %v454
        %v470 = vpack.c.b16 %v457, %v456
        %v471 = vpack.c.b16 %v459, %v458
        %v472 = vpack.c.b16 %v461, %v460
        %v473 = vpack.c.b16 %v463, %v462
        %v474 = vpack.c.b16 %v465, %v464
        %v475 = vpack.c.b16 %v467, %v466
        %484 = vmatprep.subr.bf16.mxu0 0
        %485 = vmatpush1.bf16.msra.mxu0 %v468
        %486 = vmatprep.subr.bf16.mxu0 0
        %487 = vmatpush1.bf16.msra.mxu0 %v469
        %488 = vmatprep.subr.bf16.mxu0 0
        %489 = vmatpush1.bf16.msra.mxu0 %v470
        %490 = vmatprep.subr.bf16.mxu0 0
        %491 = vmatpush1.bf16.msra.mxu0 %v471
        %492 = vmatprep.subr.bf16.mxu0 0
        %493 = vmatpush1.bf16.msra.mxu0 %v472
        %494 = vmatprep.subr.bf16.mxu0 0
        %495 = vmatpush1.bf16.msra.mxu0 %v473
        %496 = vmatprep.subr.bf16.mxu0 0
        %497 = vmatpush1.bf16.msra.mxu0 %v474
        %498 = vmatprep.subr.bf16.mxu0 0
        %499 = vmatpush1.bf16.msra.mxu0 %v475
        %500 = vmatprep.subr.bf16.mxu0 0
        %501 = vmatpush1.bf16.msra.mxu0 0
        %502 = vmatprep.subr.bf16.mxu0 0
        %503 = vmatpush1.bf16.msra.mxu0 0
        %504 = vmatprep.subr.bf16.mxu0 0
        %505 = vmatpush1.bf16.msra.mxu0 0
        %506 = vmatprep.subr.bf16.mxu0 0
        %507 = vmatpush1.bf16.msra.mxu0 0
        %508 = vmatprep.subr.bf16.mxu0 0
        %509 = vmatpush1.bf16.msra.mxu0 0
        %510 = vmatprep.subr.bf16.mxu0 0
        %511 = vmatpush1.bf16.msra.mxu0 0
        %512 = vmatprep.subr.bf16.mxu0 0
        %513 = vmatpush1.bf16.msra.mxu0 0
        %514 = vmatprep.subr.bf16.mxu0 0
        %515 = vmatpush1.bf16.msra.mxu0 0
        %516 = vmatprep.mubr.bf16.mxu0 0
        %517 = vmatmul.mubr.bf16.gmra.mrb[0].mxu0 %v412
        %v518 = vpop.f32.mrb[0].mxu0
        %v519 = vadd.f32 %v434, %v518
        %v520 = vpop.f32.mrb[0].mxu0
        %v521 = vpop.f32.mrb[0].mxu0
        %v522 = vpop.f32.mrb[0].mxu0
        %523 = vdwg.mxu0
        %v524 = vmul.f32 %v519, 0.5
        %v525 = vmul.f32 %v519, 0.70710677
        %v526 = verf.f32.pop %v525
        %v527 = vadd.f32 %v526, 1.0
        %v528 = vmul.f32 %v524, %v527
        %v529 = vld [vmem:[%s360] sm:$0xff]
        %v530 = vpack.c.bf16 %v528, %v528
        %v531 = vld [vmem:[#allocation8] sm:$0xf]
        %v532 = vld [vmem:[#allocation8 + $0x4] sm:$0xf]
        %v533 = vld [vmem:[#allocation8 + $0x8] sm:$0xf]
        %v534 = vld [vmem:[#allocation8 + $0xc] sm:$0xf]
        %v535 = vld [vmem:[#allocation8 + $0x10] sm:$0xf]
        %v536 = vld [vmem:[#allocation8 + $0x14] sm:$0xf]
        %v537 = vld [vmem:[#allocation8 + $0x18] sm:$0xf]
        %v538 = vld [vmem:[#allocation8 + $0x1c] sm:$0xf]
        %v539 = vld [vmem:[#allocation8 + $0x20] sm:$0xf]
        %v540 = vld [vmem:[#allocation8 + $0x24] sm:$0xf]
        %v541 = vld [vmem:[#allocation8 + $0x28] sm:$0xf]
        %v542 = vld [vmem:[#allocation8 + $0x2c] sm:$0xf]
        %v543 = vld [vmem:[#allocation8 + $0x30] sm:$0xf]
        %v544 = vld [vmem:[#allocation8 + $0x34] sm:$0xf]
        %v545 = vld [vmem:[#allocation8 + $0x38] sm:$0xf]
        %v546 = vld [vmem:[#allocation8 + $0x3c] sm:$0xf]
        %v563 = vunpack.c.l.b16 %v531
        %v564 = vunpack.c.l.b16 %v532
        %v565 = vunpack.c.l.b16 %v533
        %v566 = vunpack.c.l.b16 %v534
        %v567 = vunpack.c.l.b16 %v535
        %v568 = vunpack.c.l.b16 %v536
        %v569 = vunpack.c.l.b16 %v537
        %v570 = vunpack.c.l.b16 %v538
        %v571 = vunpack.c.l.b16 %v539
        %v572 = vunpack.c.l.b16 %v540
        %v573 = vunpack.c.l.b16 %v541
        %v574 = vunpack.c.l.b16 %v542
        %v575 = vunpack.c.l.b16 %v543
        %v576 = vunpack.c.l.b16 %v544
        %v577 = vunpack.c.l.b16 %v545
        %v578 = vunpack.c.l.b16 %v546
        %v579 = vpack.c.b16 %v564, %v563
        %v580 = vpack.c.b16 %v566, %v565
        %v581 = vpack.c.b16 %v568, %v567
        %v582 = vpack.c.b16 %v570, %v569
        %v583 = vpack.c.b16 %v572, %v571
        %v584 = vpack.c.b16 %v574, %v573
        %v585 = vpack.c.b16 %v576, %v575
        %v586 = vpack.c.b16 %v578, %v577
        %595 = vmatprep.subr.bf16.mxu0 0
        %596 = vmatpush1.bf16.msra.mxu0 %v579
        %597 = vmatprep.subr.bf16.mxu0 0
        %598 = vmatpush1.bf16.msra.mxu0 %v580
        %599 = vmatprep.subr.bf16.mxu0 0
        %600 = vmatpush1.bf16.msra.mxu0 %v581
        %601 = vmatprep.subr.bf16.mxu0 0
        %602 = vmatpush1.bf16.msra.mxu0 %v582
        %603 = vmatprep.subr.bf16.mxu0 0
        %604 = vmatpush1.bf16.msra.mxu0 %v583
        %605 = vmatprep.subr.bf16.mxu0 0
        %606 = vmatpush1.bf16.msra.mxu0 %v584
        %607 = vmatprep.subr.bf16.mxu0 0
        %608 = vmatpush1.bf16.msra.mxu0 %v585
        %609 = vmatprep.subr.bf16.mxu0 0
        %610 = vmatpush1.bf16.msra.mxu0 %v586
        %611 = vmatprep.subr.bf16.mxu0 0
        %612 = vmatpush1.bf16.msra.mxu0 0
        %613 = vmatprep.subr.bf16.mxu0 0
        %614 = vmatpush1.bf16.msra.mxu0 0
        %615 = vmatprep.subr.bf16.mxu0 0
        %616 = vmatpush1.bf16.msra.mxu0 0
        %617 = vmatprep.subr.bf16.mxu0 0
        %618 = vmatpush1.bf16.msra.mxu0 0
        %619 = vmatprep.subr.bf16.mxu0 0
        %620 = vmatpush1.bf16.msra.mxu0 0
        %621 = vmatprep.subr.bf16.mxu0 0
        %622 = vmatpush1.bf16.msra.mxu0 0
        %623 = vmatprep.subr.bf16.mxu0 0
        %624 = vmatpush1.bf16.msra.mxu0 0
        %625 = vmatprep.subr.bf16.mxu0 0
        %626 = vmatpush1.bf16.msra.mxu0 0
        %627 = vmatprep.mubr.bf16.mxu0 0
        %628 = vmatmul.mubr.bf16.gmra.mrb[0].mxu0 %v530
        %v629 = vpop.f32.mrb[0].mxu0
        %v630 = vadd.f32 0.0, %v629
        %v631 = vpop.f32.mrb[0].mxu0
        %v632 = vpop.f32.mrb[0].mxu0
        %v633 = vpop.f32.mrb[0].mxu0
        %634 = vdwg.mxu0
        %v635 = vadd.f32 %v529, %v630
        %636 = vst [vmem:[%s360] sm:$0xff] %v635
        %s637 = sand.u32 %s212, 1
        %s638 = scalar_lea.sflag [#allocation5], %s637
        %s639 = sand.u32 %s212, 1
        %s640 = smul.addr %s639, 8
        %s641 = scalar_lea.vmem [#allocation9], %s640
        // Predicated region
        $region65: #{tpu_custom_call.1} parent=47 // pred_check
          %p642 = pneg %p222
        $region66: #{tpu_custom_call.1} parent=47 // pred_check_branch
          %644 = sbr.rel (%p642) target = $region68
        $region67: #{tpu_custom_call.1} parent=47 // pred_region
          %s646 = ssub.s32 128, 128
          %647 = vsyncadd %s638, %s646
          %s648 = smul.addr %s29, 128
          %s649 = scalar_lea.hbm %s7, %s648
          %s651 = sshll.u32 %s641, 4
          %s652 = int_to_ptr.vmem [resolvable:$true] %s651
          %654 = dma.vmem_to_hbm [thread:$0]  %s652, 128, %s649, %s638
        $region68: #{tpu_custom_call.1} parent=47 // pred_fallthru
          _
      $region48: #{tpu_custom_call.1} parent=5 // pred_fallthru
        _
      %p655 = scmp.le.s32.totalorder 2, %s20
      // Predicated region
      $region69: #{tpu_custom_call.1} parent=5 // pred_check
        %p656 = pneg %p655
      $region70: #{tpu_custom_call.1} parent=5 // pred_check_branch
        %658 = sbr.rel (%p656) target = $region72
      $region71: #{tpu_custom_call.1} parent=5 // pred_region
        %s659 = ssub.s32 %s20, 2
        // Predicated region
        $region73: #{tpu_custom_call.1} parent=71 // pred_check
          %p660 = pneg %p228
        $region74: #{tpu_custom_call.1} parent=71 // pred_check_branch
          %662 = sbr.rel (%p660) target = $region76
        $region75: #{tpu_custom_call.1} parent=71 // pred_region
          %s663 = sand.u32 %s213, 1
          %s664 = scalar_lea.sflag [#allocation5], %s663
          %s665 = sand.u32 %s213, 1
          %s666 = smul.addr %s665, 8
          %s667 = scalar_lea.vmem [#allocation9], %s666
          %668 = dma.done %s664, 128
        $region76: #{tpu_custom_call.1} parent=71 // pred_fallthru
          _
      $region72: #{tpu_custom_call.1} parent=5 // pred_fallthru
        _
    $region6: #{tpu_custom_call.1} parent=1 // loop_footer
      %s24 = sadd.s32 1, %s20
    $region7: #{tpu_custom_call.1} parent=1 // loop_footer_branch
      %19 = sbr.rel target = $region3
    $region8: #{tpu_custom_call.1} parent=1 // loop_exit
      _
    %669 = vsyncpa [#allocation4], 1
    %s670 = scalar_lea.sflag [#allocation4], 1
    %671 = vsyncpa %s670, 1
    %672 = vsyncpa [#allocation7], 1
    %673 = vsyncpa [#allocation5], 1
    %s674 = scalar_lea.sflag [#allocation5], 1
    %675 = vsyncpa %s674, 1

</llo_original>
